<compile_context>
chip_gen: v5e
topology: v5e:2x2
jax: 0.10.0
libtpu: 0.0.40
codegen_flags: <defaults>
</compile_context>

<pallas_src>
import jax
import jax.numpy as jnp
from jax.experimental import pallas as pl
from jax.experimental.pallas import tpu as pltpu


def _locked_dropout_kernel(mask_ref, x_ref, o_ref):
    """mask_ref: (1, bh) scaled keep-mask tile; x_ref/o_ref: (tt, bh) tile."""
    # Mask is already scaled by 1/keep and cast to x.dtype in the wrapper;
    # per-tile work is one broadcast multiply (mem-bound kernel).
    o_ref[...] = x_ref[...] * mask_ref[...]


def locked_dropout(x, dropout=0.5, *, training=True, key=None, seed=0,
                   donate_input=False):
    """JAX wrapper matching LockedDropout.forward(x, dropout).

    Pass a fresh `key` (or `seed`) every call in training, like PyTorch does
    implicitly via its global RNG.
    """
    if (not training) or (not dropout):
        return x

    T, B, H = x.shape
    BH = B * H
    keep = 1.0 - float(dropout)

    # Sample the (1, B*H) mask ONCE -- shared ("locked") across the time axis.
    # Compute keep-mask * 1/keep in f32, cast to x.dtype exactly once.
    if key is None:
        key = jax.random.PRNGKey(seed)
    mask = jax.random.bernoulli(key, p=keep, shape=(1, BH)).astype(jnp.float32)
    mask = (mask * (1.0 / keep)).astype(x.dtype)

    # Lane-dense 2-D view: H (and B) map onto the lane axis.
    x2 = x.reshape(T, BH)

    itemsize = jnp.dtype(x.dtype).itemsize
    # Native sublane multiple: 8 for f32, 16 for bf16, 32 for int8/fp8.
    sub = max(8, 32 // itemsize)

    # Generation-aware VMEM budget / tile target.
    try:
        vmem_cap = pltpu.get_tpu_info().vmem_capacity_bytes
    except Exception:
        vmem_cap = 64 << 20  # conservative (v7x-sized) fallback
    if vmem_cap <= (64 << 20):          # v7x: 64 MiB physical per TC
        buf_budget = 40 << 20
        target_tile_bytes = 8 << 20
    else:                               # v5e / v6e: 128 MiB physical
        buf_budget = 80 << 20
        target_tile_bytes = 16 << 20

    # Lane-dim (BH) tiling: only needed if even a minimal-height tile of the
    # full BH width would blow the per-tile target; keep multiples of 128.
    if BH % 128 == 0 and sub * BH * itemsize > target_tile_bytes:
        bh = (target_tile_bytes // (sub * itemsize)) // 128 * 128
        bh = int(max(128, bh))
    else:
        bh = BH                          # full lane extent (always legal)
    row_bytes = bh * itemsize

    # T-dim tile: as many sublane-multiples as fit in the target tile size.
    if T <= sub:
        tt = T                           # full dim (always legal)
    else:
        tt = (target_tile_bytes // max(row_bytes, 1)) // sub * sub
        tt = int(max(sub, min(T, tt)))
        # Keep >= 4 grid steps along T when T allows it, so v7x's two
        # TensorCores both get work and the DMA pipeline stays overlapped.
        min_steps = 4
        if T >= min_steps * sub:
            max_tt = (T // min_steps) // sub * sub
            tt = int(max(sub, min(tt, max_tt)))

    grid = (pl.cdiv(T, tt), pl.cdiv(BH, bh))

    # 2 buffers for the input tile + 2 for the output tile + mask + headroom,
    # clamped to the generation-aware budget (well below physical VMEM).
    need = 4 * tt * row_bytes + 4 * sub * row_bytes + (2 << 20)
    vmem_bytes = int(min(max(need, 16 << 20), buf_budget))

    kwargs = {}
    if donate_input:
        # x2 is input index 1 (after mask); reuse its HBM buffer for the output.
        kwargs["input_output_aliases"] = {1: 0}

    out2 = pl.pallas_call(
        _locked_dropout_kernel,
        out_shape=jax.ShapeDtypeStruct((T, BH), x.dtype),
        grid=grid,
        in_specs=[
            pl.BlockSpec((1, bh), lambda t, c: (0, c)),    # shared mask tile
            pl.BlockSpec((tt, bh), lambda t, c: (t, c)),   # x tile (pipelined)
        ],
        out_specs=pl.BlockSpec((tt, bh), lambda t, c: (t, c)),
        compiler_params=pltpu.CompilerParams(
            dimension_semantics=("parallel", "parallel"),  # tiles independent
            vmem_limit_bytes=vmem_bytes,
        ),
        cost_estimate=pl.CostEstimate(
            flops=T * BH,
            bytes_accessed=(2 * T * BH + BH) * itemsize,
            transcendentals=0,
        ),
        **kwargs,
    )(mask, x2)
    return out2.reshape(T, B, H)


if __name__ == "__main__":
    key = jax.random.PRNGKey(0)
    T, B, H = 8, 4, 32  # (seq, batch, hidden) -> B*H = 128 lanes (dense)
    x = jax.random.normal(key, (T, B, H), dtype=jnp.float32)

    dropout = 0.5
    out = locked_dropout(x, dropout=dropout, training=True, seed=1234)
    out = jax.block_until_ready(out)

    # Sanity checks of the LockedDropout semantics.
    keep = 1.0 - dropout
    # Every element is either 0 or x / keep.
    zero_or_scaled = jnp.logical_or(
        jnp.isclose(out, 0.0),
        jnp.isclose(out, x / keep, rtol=1e-5, atol=1e-6),
    )
    assert bool(jnp.all(zero_or_scaled)), "output not {0, x/keep}"
    # The dropped positions are identical ("locked") across the time axis.
    dropped = jnp.isclose(out, 0.0) & (~jnp.isclose(x, 0.0))
    assert bool(jnp.all(dropped == dropped[0:1])), "mask not shared across time"
    # Something is actually dropped and something is kept (p=0.5, 128 slots).
    assert bool(jnp.any(dropped)) and bool(~jnp.all(dropped)), "degenerate mask"
    # Eval mode / dropout=0 is a passthrough.
    assert bool(jnp.all(locked_dropout(x, dropout=0.5, training=False) == x))
    assert bool(jnp.all(locked_dropout(x, dropout=0.0, training=True) == x))

    # Larger shape exercising the T tiling / >=4-step path (still cheap).
    T2, B2, H2 = 256, 8, 64
    x2 = jax.random.normal(jax.random.PRNGKey(1), (T2, B2, H2), jnp.float32)
    out2 = jax.block_until_ready(
        locked_dropout(x2, dropout=0.3, training=True, seed=7))
    d2 = jnp.isclose(out2, 0.0) & (~jnp.isclose(x2, 0.0))
    assert bool(jnp.all(d2 == d2[0:1])), "mask not shared across time (large)"

    print("KERNEL_OK")
</pallas_src>

<mosaic_0001>
module attributes {stable_mosaic.version = 11 : i64} {
  func.func @_locked_dropout_kernel(%arg0: i32, %arg1: i32, %arg2: memref<1x128xf32, #tpu.memory_space<vmem>>, %arg3: memref<8x128xf32, #tpu.memory_space<vmem>>, %arg4: memref<8x128xf32, #tpu.memory_space<vmem>>) attributes {dimension_semantics = [#tpu.dimension_semantics<parallel>, #tpu.dimension_semantics<parallel>], iteration_bounds = array<i64: 1, 1>, scalar_prefetch = 0 : i64, scratch_operands = 0 : i64, tpu.core_type = #tpu.core_type<tc>, window_params = [{transform_indices = @transform_0, window_bounds = array<i64: 1, 128>}, {transform_indices = @transform_1, window_bounds = array<i64: 8, 128>}, {transform_indices = @transform_2, window_bounds = array<i64: 8, 128>}]} {
    %c0 = arith.constant 0 : index
    %c0_0 = arith.constant 0 : index
    %0 = vector.load %arg3[%c0, %c0_0] : memref<8x128xf32, #tpu.memory_space<vmem>>, vector<8x128xf32>
    %c0_1 = arith.constant 0 : index
    %c0_2 = arith.constant 0 : index
    %1 = vector.load %arg2[%c0_1, %c0_2] : memref<1x128xf32, #tpu.memory_space<vmem>>, vector<1x128xf32>
    %2 = vector.broadcast %1 : vector<1x128xf32> to vector<8x128xf32>
    %3 = arith.mulf %0, %2 : vector<8x128xf32>
    %c0_3 = arith.constant 0 : index
    %c0_4 = arith.constant 0 : index
    %4 = vector.load %arg4[%c0_3, %c0_4] : memref<8x128xf32, #tpu.memory_space<vmem>>, vector<8x128xf32>
    tpu.vector_store %arg4[%c0_3, %c0_4], %3 {strides = array<i32>} : memref<8x128xf32, #tpu.memory_space<vmem>>, vector<8x128xf32>,
    return
  }
  func.func @transform_0(%arg0: i32, %arg1: i32) -> (i32, i32) {
    %c0_i32 = arith.constant 0 : i32
    %c0_i32_0 = arith.constant 0 : i32
    return %c0_i32, %arg1 : i32, i32
  }
  func.func @transform_1(%arg0: i32, %arg1: i32) -> (i32, i32) {
    %c0_i32 = arith.constant 0 : i32
    return %arg0, %arg1 : i32, i32
  }
  func.func @transform_2(%arg0: i32, %arg1: i32) -> (i32, i32) {
    %c0_i32 = arith.constant 0 : i32
    return %arg0, %arg1 : i32, i32
  }
}

</mosaic_0001>

<llo_original>
// kernel: tpu_custom_call.1
$region0: #{tpu_custom_call.1}
  #allocation0 [shape = 'u32[]', space=smem, size = 0x4, offset = 0x4, fixed_abs, tag = 'smem constant byte address 0x4 - core index']
  #allocation1 [shape = 'u32[72,128]{1,0:T(1,128)}', space=vmem, size = 0x9000, scoped, tag = 'internal scratch']
  %s0 = inlined_call_operand.hbm [shape: f32[1,128], index: 0, kind: input, shape index: {}]
  %s1 = inlined_call_operand.hbm [shape: f32[8,128], index: 1, kind: input, shape index: {}]
  %s2 = inlined_call_operand.hbm [shape: f32[8,128], index: 2, kind: output, shape index: {}]
  %s3 = sld [smem:[#allocation0]]
  $region26: #{tpu_custom_call.1} parent=0
    _
  %s5 = ssub.s32 1, %s3
  %s6 = scalar_select 0, %s5, %s3
  $region1: #{tpu_custom_call.1} parent=0
    #allocation2 [shape = 'u8[512]{0}', space=vmem, size = 0x400, scoped, tag = 'input window, operand 0, single buffered']
    #allocation3 [shape = 's32[1]{0}', space=sflag, size = 0x4, scoped, tag = 'scoped memory for tpu_custom_call.1']
    #allocation4 [shape = 's32[1]{0}', space=sflag, size = 0x4, scoped, tag = 'scoped memory for tpu_custom_call.1']
    #allocation5 [shape = 'u8[4096]{0}', space=vmem, size = 0x1000, scoped, tag = 'input window, operand 1, single buffered']
    #allocation6 [shape = 's32[1]{0}', space=sflag, size = 0x4, scoped, tag = 'scoped memory for tpu_custom_call.1']
    #allocation7 [shape = 'u8[4096]{0}', space=vmem, size = 0x1000, scoped, tag = 'output window, operand 0, single buffered']
    %7 = vsyncpa [#allocation3], 0
    %8 = vsyncpa [#allocation6], 0
    %9 = vsyncpa [#allocation4], 0
    // Predicated region
    $region2: #{tpu_custom_call.1} parent=1 // pred_check
      _
    $region3: #{tpu_custom_call.1} parent=1 // pred_check_branch
      %11 = sbr.rel (0) target = $region5
    $region4: #{tpu_custom_call.1} parent=1 // pred_region
      %13 = vsyncadd [#allocation3], 0
      %s15 = sshll.u32 %s0, 4
      %s16 = int_to_ptr.hbm [resolvable:$true] %s15
      %s17 = sshll.u32 [#allocation2], 4
      %s18 = int_to_ptr.vmem [resolvable:$true] %s17
      %20 = dma.hbm_to_vmem [thread:$0]  %s16, 16, %s18, [#allocation3]
    $region5: #{tpu_custom_call.1} parent=1 // pred_fallthru
      _
    // Predicated region
    $region6: #{tpu_custom_call.1} parent=1 // pred_check
      _
    $region7: #{tpu_custom_call.1} parent=1 // pred_check_branch
      %22 = sbr.rel (0) target = $region9
    $region8: #{tpu_custom_call.1} parent=1 // pred_region
      %24 = vsyncadd [#allocation6], 0
      %s26 = sshll.u32 %s1, 4
      %s27 = int_to_ptr.hbm [resolvable:$true] %s26
      %s28 = sshll.u32 [#allocation5], 4
      %s29 = int_to_ptr.vmem [resolvable:$true] %s28
      %31 = dma.hbm_to_vmem [thread:$0]  %s27, 128, %s29, [#allocation6]
    $region9: #{tpu_custom_call.1} parent=1 // pred_fallthru
      _
    // Predicated region
    $region10: #{tpu_custom_call.1} parent=1 // pred_check
      _
    $region11: #{tpu_custom_call.1} parent=1 // pred_check_branch
      %33 = sbr.rel (0) target = $region13
    $region12: #{tpu_custom_call.1} parent=1 // pred_region
      %35 = dma.done [#allocation3], 16
    $region13: #{tpu_custom_call.1} parent=1 // pred_fallthru
      _
    // Predicated region
    $region14: #{tpu_custom_call.1} parent=1 // pred_check
      _
    $region15: #{tpu_custom_call.1} parent=1 // pred_check_branch
      %37 = sbr.rel (0) target = $region17
    $region16: #{tpu_custom_call.1} parent=1 // pred_region
      %39 = dma.done [#allocation6], 128
    $region17: #{tpu_custom_call.1} parent=1 // pred_fallthru
      _
    %v40 = vld [vmem:[#allocation5] sm:$0xff]
    %v41 = vld [vmem:[#allocation2] sm:$0x1]
    %v43 = vperm.slane %v41, 0
    %v45 = vmul.f32 %v40, %v43
    %46 = vst [vmem:[#allocation7] sm:$0xff] %v45
    // Predicated region
    $region18: #{tpu_custom_call.1} parent=1 // pred_check
      _
    $region19: #{tpu_custom_call.1} parent=1 // pred_check_branch
      %48 = sbr.rel (0) target = $region21
    $region20: #{tpu_custom_call.1} parent=1 // pred_region
      %50 = vsyncadd [#allocation4], 0
      %s52 = sshll.u32 [#allocation7], 4
      %s53 = int_to_ptr.vmem [resolvable:$true] %s52
      %s54 = sshll.u32 %s2, 4
      %s55 = int_to_ptr.hbm [resolvable:$true] %s54
      %57 = dma.vmem_to_hbm [thread:$0]  %s53, 128, %s55, [#allocation4]
    $region21: #{tpu_custom_call.1} parent=1 // pred_fallthru
      _
    // Predicated region
    $region22: #{tpu_custom_call.1} parent=1 // pred_check
      _
    $region23: #{tpu_custom_call.1} parent=1 // pred_check_branch
      %59 = sbr.rel (0) target = $region25
    $region24: #{tpu_custom_call.1} parent=1 // pred_region
      %61 = dma.done [#allocation4], 128
    $region25: #{tpu_custom_call.1} parent=1 // pred_fallthru
      _
    %62 = vsyncpa [#allocation3], 1
    %63 = vsyncpa [#allocation6], 1
    %64 = vsyncpa [#allocation4], 1

</llo_original>
